<compile_context>
chip_gen: v7x
topology: tpu7x:2x2x1
jax: 0.10.0
libtpu: 0.0.40
codegen_flags: <defaults>
</compile_context>

<pallas_src>
import numpy as np
import jax
import jax.numpy as jnp
from jax.experimental import pallas as pl
from jax.experimental.pallas import tpu as pltpu


def _linear_kernel_f32(x_ref, w_ref, b_ref, o_ref):
    """f32 output: accumulate directly into the output block (resident across
    the K grid axis because its index_map ignores k). No scratch, no finalize
    copy; bias is seeded exactly once at k == 0."""
    k = pl.program_id(2)

    @pl.when(k == 0)
    def _init():
        o_ref[...] = jnp.broadcast_to(b_ref[...].astype(jnp.float32), o_ref.shape)

    o_ref[...] += jnp.dot(x_ref[...], w_ref[...], preferred_element_type=jnp.float32)


def _linear_kernel_acc(x_ref, w_ref, b_ref, o_ref, acc_ref):
    """Narrow output dtypes: f32 VMEM accumulator, single downcast at finalize."""
    k = pl.program_id(2)

    @pl.when(k == 0)
    def _init():
        acc_ref[...] = jnp.broadcast_to(b_ref[...].astype(jnp.float32), acc_ref.shape)

    acc_ref[...] += jnp.dot(x_ref[...], w_ref[...], preferred_element_type=jnp.float32)

    @pl.when(k == pl.num_programs(2) - 1)
    def _finalize():
        o_ref[...] = acc_ref[...].astype(o_ref.dtype)


def _round_up(x, m):
    return ((x + m - 1) // m) * m


def _pick_tile(dim, align, cap):
    """Pick a tile: multiple of `align`, <= cap, preferring tiles that divide
    the aligned dim (no zero-padding / wasted DMA & MXU work). Fall back to the
    cap (and padding) only when the best dividing tile is much smaller."""
    dp = _round_up(dim, align)
    if dp <= cap:
        return dp  # whole dimension in one block
    t = (cap // align) * align
    while t >= align:
        if dp % t == 0:
            break
        t -= align
    if t >= align and 2 * t >= cap:
        return t  # dividing tile within 2x of the cap -> no padding
    return (cap // align) * align  # pad; K padding stays zero-filled (load-bearing)


def my_linear(x, W, b, *, tm=None, tn=None, tk=None, cast_inputs_to_bf16=False):
    """Pallas implementation of MyLinear.forward: x @ W + b."""
    M, K = x.shape
    K2, N = W.shape
    assert K == K2, "input_dim mismatch"
    assert b.shape == (N,), "bias shape mismatch"

    out_dtype = np.dtype(jnp.result_type(x.dtype, W.dtype))

    # Chip-aware VMEM capacity (v5e/v6e: 128 MiB, v7x: 64 MiB per TensorCore).
    try:
        vmem_capacity = int(pltpu.get_tpu_info().vmem_capacity_bytes)
    except Exception:
        vmem_capacity = 128 * 1024 * 1024

    # Tile caps sized to use the available VMEM while leaving compiler headroom.
    if vmem_capacity >= 96 * 1024 * 1024:
        cap_m, cap_n, cap_k = 512, 1024, 2048   # v5e / v6e (128 MiB VMEM)
    else:
        cap_m, cap_n, cap_k = 512, 512, 1024    # v7x (64 MiB VMEM)

    align_m = 16 if cast_inputs_to_bf16 else 8  # bf16 packs 2 rows per sublane

    tm = tm if tm is not None else _pick_tile(M, align_m, cap_m)
    tn = tn if tn is not None else _pick_tile(N, 128, cap_n)
    tk = tk if tk is not None else _pick_tile(K, 128, cap_k)

    Mp = _round_up(M, tm)
    Np = _round_up(N, tn)
    Kp = _round_up(K, tk)

    # Megacore (v7x has 2 TensorCores): make sure at least one "parallel" grid
    # axis has >= 2 blocks for skinny-M linears so the second core has work.
    if Mp // tm == 1 and Np // tn == 1 and tn >= 256 and tn % 256 == 0:
        tn //= 2

    # Zero-pad only when a tile does not divide: zeros are inert in the K
    # reduction, extra M/N rows/cols are cropped after the call.
    xp = x if (Mp, Kp) == (M, K) else jnp.pad(x, ((0, Mp - M), (0, Kp - K)))
    Wp = W if (Kp, Np) == (K, N) else jnp.pad(W, ((0, Kp - K), (0, Np - N)))
    bp = b if Np == N else jnp.pad(b, (0, Np - N))

    if cast_inputs_to_bf16:
        # Opt-in: bf16 MXU peak + halved HBM traffic; f32 accumulation is kept,
        # but numerics differ from the f32 PyTorch reference.
        xp = xp.astype(jnp.bfloat16)
        Wp = Wp.astype(jnp.bfloat16)

    b2d = bp.reshape(1, Np).astype(jnp.float32)  # 2-D bias, TPU-friendly layout

    grid = (Mp // tm, Np // tn, Kp // tk)

    use_acc_scratch = out_dtype != np.dtype(np.float32)
    kernel = _linear_kernel_acc if use_acc_scratch else _linear_kernel_f32
    scratch_shapes = [pltpu.VMEM((tm, tn), jnp.float32)] if use_acc_scratch else []

    # VMEM budget: double-buffered x/W/bias tiles + double-buffered output tile
    # (+ f32 accumulator for narrow outputs), 2x headroom, clamped per chip
    # (~80% of physical, <=100 MiB) so v5e/v6e can use their full VMEM and v7x
    # keeps headroom for compiler-internal scratch.
    vmem_needed = (
        2 * (tm * tk * xp.dtype.itemsize + tk * tn * Wp.dtype.itemsize + tn * 4)
        + 2 * tm * tn * out_dtype.itemsize
        + (tm * tn * 4 if use_acc_scratch else 0)
    )
    vmem_cap = int(min(0.80 * vmem_capacity, 100 * 1024 * 1024))
    vmem_limit = int(min(max(2 * vmem_needed, 32 * 1024 * 1024), vmem_cap))

    out = pl.pallas_call(
        kernel,
        out_shape=jax.ShapeDtypeStruct((Mp, Np), out_dtype),
        grid_spec=pltpu.PrefetchScalarGridSpec(
            num_scalar_prefetch=0,
            grid=grid,
            in_specs=[
                pl.BlockSpec((tm, tk), lambda i, j, k: (i, k)),   # x tile
                pl.BlockSpec((tk, tn), lambda i, j, k: (k, j)),   # W tile
                pl.BlockSpec((1, tn), lambda i, j, k: (0, j)),    # bias column tile
            ],
            out_specs=pl.BlockSpec((tm, tn), lambda i, j, k: (i, j)),
            scratch_shapes=scratch_shapes,
        ),
        compiler_params=pltpu.CompilerParams(
            dimension_semantics=("parallel", "parallel", "arbitrary"),
            vmem_limit_bytes=vmem_limit,
        ),
    )(xp, Wp, b2d)

    if (Mp, Np) != (M, N):
        out = out[:M, :N]
    return out


if __name__ == "__main__":
    # Deterministic parameter + input init (synthetic, mirrors torch.randn shapes).
    key = jax.random.PRNGKey(0)

    # --- small toy shapes matching the module usage ---
    batch, input_dim, output_dim = 8, 32, 64
    kx, kw, kb = jax.random.split(key, 3)
    x = jax.random.normal(kx, (batch, input_dim), dtype=jnp.float32)
    W = jax.random.normal(kw, (input_dim, output_dim), dtype=jnp.float32)
    b = jax.random.normal(kb, (output_dim,), dtype=jnp.float32)

    out = my_linear(x, W, b)
    jax.block_until_ready(out)
    ref = x @ W + b
    assert out.shape == (batch, output_dim)
    assert jnp.allclose(out, ref, atol=1e-4, rtol=1e-4)

    # --- non-tile-multiple shape: exercises the padding-free divisor tiling
    #     (K=640 -> tk=640 whole-K block, no zero padding) ---
    kx2, kw2, kb2 = jax.random.split(jax.random.PRNGKey(1), 3)
    M2, K2, N2 = 16, 640, 384
    x2 = jax.random.normal(kx2, (M2, K2), dtype=jnp.float32)
    W2 = jax.random.normal(kw2, (K2, N2), dtype=jnp.float32)
    b2 = jax.random.normal(kb2, (N2,), dtype=jnp.float32)

    out2 = my_linear(x2, W2, b2)
    jax.block_until_ready(out2)
    ref2 = jnp.dot(x2, W2, precision=jax.lax.Precision.HIGHEST) + b2
    assert out2.shape == (M2, N2)
    assert jnp.allclose(out2, ref2, atol=2e-3, rtol=2e-3)

    # --- multi-step K reduction + megacore N-split: K=2560 gets a dividing tk
    #     (1280 on 128 MiB chips, 640 on v7x), grid gets >=2 parallel N blocks ---
    kx3, kw3, kb3 = jax.random.split(jax.random.PRNGKey(2), 3)
    M3, K3, N3 = 32, 2560, 256
    x3 = jax.random.normal(kx3, (M3, K3), dtype=jnp.float32)
    W3 = jax.random.normal(kw3, (K3, N3), dtype=jnp.float32)
    b3 = jax.random.normal(kb3, (N3,), dtype=jnp.float32)

    out3 = my_linear(x3, W3, b3)
    jax.block_until_ready(out3)
    ref3 = jnp.dot(x3, W3, precision=jax.lax.Precision.HIGHEST) + b3
    assert out3.shape == (M3, N3)
    assert jnp.allclose(out3, ref3, atol=1e-2, rtol=5e-3)

    print("KERNEL_OK")
</pallas_src>

<mosaic_0001>
module attributes {stable_mosaic.version = 11 : i64} {
  func.func @_linear_kernel_f32(%arg0: i32, %arg1: i32, %arg2: i32, %arg3: memref<8x128xf32, #tpu.memory_space<vmem>>, %arg4: memref<128x128xf32, #tpu.memory_space<vmem>>, %arg5: memref<1x128xf32, #tpu.memory_space<vmem>>, %arg6: memref<8x128xf32, #tpu.memory_space<vmem>>) attributes {dimension_semantics = [#tpu.dimension_semantics<parallel>, #tpu.dimension_semantics<parallel>, #tpu.dimension_semantics<arbitrary>], iteration_bounds = array<i64: 1, 1, 1>, scalar_prefetch = 0 : i64, scratch_operands = 0 : i64, tpu.core_type = #tpu.core_type<tc>, window_params = [{transform_indices = @transform_0, window_bounds = array<i64: 8, 128>}, {transform_indices = @transform_1, window_bounds = array<i64: 128, 128>}, {transform_indices = @transform_2, window_bounds = array<i64: 1, 128>}, {transform_indices = @transform_3, window_bounds = array<i64: 8, 128>}]} {
    %c0_i32 = arith.constant 0 : i32
    %0 = arith.cmpi eq, %arg2, %c0_i32 : i32
    %1 = arith.extui %0 : i1 to i32
    %c0_i32_0 = arith.constant 0 : i32
    %2 = arith.cmpi ne, %1, %c0_i32_0 : i32
    scf.if %2 {
      %c0_8 = arith.constant 0 : index
      %c0_9 = arith.constant 0 : index
      %9 = vector.load %arg5[%c0_8, %c0_9] : memref<1x128xf32, #tpu.memory_space<vmem>>, vector<1x128xf32>
      %10 = vector.shape_cast %9 : vector<1x128xf32> to vector<1x128xf32>
      %11 = vector.broadcast %10 : vector<1x128xf32> to vector<8x128xf32>
      %c0_10 = arith.constant 0 : index
      %c0_11 = arith.constant 0 : index
      %12 = vector.load %arg6[%c0_10, %c0_11] : memref<8x128xf32, #tpu.memory_space<vmem>>, vector<8x128xf32>
      tpu.vector_store %arg6[%c0_10, %c0_11], %11 {strides = array<i32>} : memref<8x128xf32, #tpu.memory_space<vmem>>, vector<8x128xf32>,
    } else {
    }
    %c0 = arith.constant 0 : index
    %c0_1 = arith.constant 0 : index
    %3 = vector.load %arg6[%c0, %c0_1] : memref<8x128xf32, #tpu.memory_space<vmem>>, vector<8x128xf32>
    %c0_2 = arith.constant 0 : index
    %c0_3 = arith.constant 0 : index
    %4 = vector.load %arg3[%c0_2, %c0_3] : memref<8x128xf32, #tpu.memory_space<vmem>>, vector<8x128xf32>
    %c0_4 = arith.constant 0 : index
    %c0_5 = arith.constant 0 : index
    %5 = vector.load %arg4[%c0_4, %c0_5] : memref<128x128xf32, #tpu.memory_space<vmem>>, vector<128x128xf32>
    %cst = arith.constant dense<0.000000e+00> : vector<8x128xf32>
    %6 = tpu.matmul %4, %5, %cst {dimension_numbers = #tpu.dot_dimension_numbers<[1], [0], [0], [1], [0, 0, 1, 1], [], []>} : vector<8x128xf32>, vector<128x128xf32>, vector<8x128xf32> -> vector<8x128xf32>
    %7 = arith.addf %3, %6 : vector<8x128xf32>
    %c0_6 = arith.constant 0 : index
    %c0_7 = arith.constant 0 : index
    %8 = vector.load %arg6[%c0_6, %c0_7] : memref<8x128xf32, #tpu.memory_space<vmem>>, vector<8x128xf32>
    tpu.vector_store %arg6[%c0_6, %c0_7], %7 {strides = array<i32>} : memref<8x128xf32, #tpu.memory_space<vmem>>, vector<8x128xf32>,
    return
  }
  func.func @transform_0(%arg0: i32, %arg1: i32, %arg2: i32) -> (i32, i32) {
    %c0_i32 = arith.constant 0 : i32
    return %arg0, %arg2 : i32, i32
  }
  func.func @transform_1(%arg0: i32, %arg1: i32, %arg2: i32) -> (i32, i32) {
    %c0_i32 = arith.constant 0 : i32
    return %arg2, %arg1 : i32, i32
  }
  func.func @transform_2(%arg0: i32, %arg1: i32, %arg2: i32) -> (i32, i32) {
    %c0_i32 = arith.constant 0 : i32
    %c0_i32_0 = arith.constant 0 : i32
    return %c0_i32, %arg1 : i32, i32
  }
  func.func @transform_3(%arg0: i32, %arg1: i32, %arg2: i32) -> (i32, i32) {
    %c0_i32 = arith.constant 0 : i32
    return %arg0, %arg1 : i32, i32
  }
}

</mosaic_0001>

<llo_original>
// kernel: tpu_custom_call.1
$region0: #{tpu_custom_call.1}
  #allocation0 [shape = 'u32[]', space=smem, size = 0x4, offset = 0x4, fixed_abs, tag = 'smem constant byte address 0x4 - core index']
  #allocation1 [shape = 'u32[144,128]{1,0:T(1,128)}', space=vmem, size = 0x12000, scoped, tag = 'internal scratch']
  %s0 = inlined_call_operand.hbm [shape: f32[8,128], index: 0, kind: input, shape index: {}]
  %s1 = inlined_call_operand.hbm [shape: f32[128,128], index: 1, kind: input, shape index: {}]
  %s2 = inlined_call_operand.vmem [shape: f32[1,128], index: 2, kind: input, shape index: {}]
  %s3 = inlined_call_operand.hbm [shape: f32[8,128], index: 3, kind: output, shape index: {}]
  %s4 = sld [smem:[#allocation0]]
  $region34: #{tpu_custom_call.1} parent=0
    _
  %s6 = ssub.s32 1, %s4
  %s7 = scalar_select 0, %s6, %s4
  $region1: #{tpu_custom_call.1} parent=0
    #allocation2 [shape = 'u8[4096]{0}', space=vmem, size = 0x1000, scoped, tag = 'input window, operand 0, single buffered']
    #allocation3 [shape = 's32[1]{0}', space=sflag, size = 0x4, scoped, tag = 'scoped memory for tpu_custom_call.1']
    #allocation4 [shape = 's32[1]{0}', space=sflag, size = 0x4, scoped, tag = 'scoped memory for tpu_custom_call.1']
    #allocation5 [shape = 'u8[65536]{0}', space=vmem, size = 0x10000, scoped, tag = 'input window, operand 1, single buffered']
    #allocation6 [shape = 's32[1]{0}', space=sflag, size = 0x4, scoped, tag = 'scoped memory for tpu_custom_call.1']
    #allocation7 [shape = 'u8[4096]{0}', space=vmem, size = 0x1000, scoped, tag = 'output window, operand 0, single buffered']
    %8 = vsyncpa [#allocation3], 0
    %9 = vsyncpa [#allocation6], 0
    %10 = vsyncpa [#allocation4], 0
    // Predicated region
    $region2: #{tpu_custom_call.1} parent=1 // pred_check
      _
    $region3: #{tpu_custom_call.1} parent=1 // pred_check_branch
      %12 = sbr.rel (0) target = $region5
    $region4: #{tpu_custom_call.1} parent=1 // pred_region
      %s14 = ssub.s32 128, 128
      %15 = vsyncadd [#allocation3], %s14
      %s17 = sshll.u32 [#allocation2], 4
      %s18 = int_to_ptr.vmem [resolvable:$true] %s17
      %20 = dma.hbm_to_vmem [thread:$0]  %s0, 128, %s18, [#allocation3]
    $region5: #{tpu_custom_call.1} parent=1 // pred_fallthru
      _
    // Predicated region
    $region6: #{tpu_custom_call.1} parent=1 // pred_check
      _
    $region7: #{tpu_custom_call.1} parent=1 // pred_check_branch
      %22 = sbr.rel (0) target = $region9
    $region8: #{tpu_custom_call.1} parent=1 // pred_region
      %s24 = ssub.s32 2048, 2048
      %25 = vsyncadd [#allocation6], %s24
      %s26 = sshll.u32 [#allocation5], 4
      %s27 = int_to_ptr.vmem [resolvable:$true] %s26
      %32 = dma.hbm_to_vmem [thread:$0]  %s1, 2048, %s27, [#allocation6], 128, 128, 8
    $region9: #{tpu_custom_call.1} parent=1 // pred_fallthru
      _
    // Predicated region
    $region10: #{tpu_custom_call.1} parent=1 // pred_check
      _
    $region11: #{tpu_custom_call.1} parent=1 // pred_check_branch
      %34 = sbr.rel (0) target = $region13
    $region12: #{tpu_custom_call.1} parent=1 // pred_region
      _
    $region13: #{tpu_custom_call.1} parent=1 // pred_fallthru
      _
    // Predicated region
    $region14: #{tpu_custom_call.1} parent=1 // pred_check
      _
    $region15: #{tpu_custom_call.1} parent=1 // pred_check_branch
      %36 = sbr.rel (0) target = $region17
    $region16: #{tpu_custom_call.1} parent=1 // pred_region
      %37 = dma.done [#allocation3], 128
    $region17: #{tpu_custom_call.1} parent=1 // pred_fallthru
      _
    // Predicated region
    $region18: #{tpu_custom_call.1} parent=1 // pred_check
      _
    $region19: #{tpu_custom_call.1} parent=1 // pred_check_branch
      %39 = sbr.rel (0) target = $region21
    $region20: #{tpu_custom_call.1} parent=1 // pred_region
      %40 = dma.done [#allocation6], 2048
    $region21: #{tpu_custom_call.1} parent=1 // pred_fallthru
      _
    %p41 = scmp.eq.s32.totalorder 0, 0
    // Predicated region
    $region22: #{tpu_custom_call.1} parent=1 // pred_check
      %p42 = pneg %p41
    $region23: #{tpu_custom_call.1} parent=1 // pred_check_branch
      %44 = sbr.rel (%p42) target = $region25
    $region24: #{tpu_custom_call.1} parent=1 // pred_region
      %v45 = vld [vmem:[%s2] sm:$0x1]
      %v47 = vlaneseq
      %v48 = vshrl.u32 %v47, 7
      %v49 = vsub.s32 0, %v48
      %v50 = vrot.slane %v45, %v49
      %52 = vst [vmem:[#allocation7] sm:$0xff] %v50
    $region25: #{tpu_custom_call.1} parent=1 // pred_fallthru
      _
    %v53 = vld [vmem:[#allocation7] sm:$0xff]
    %v54 = vld [vmem:[#allocation2] sm:$0xff]
    %v55 = vld [vmem:[#allocation5] sm:$0xff]
    %v56 = vld [vmem:[#allocation5 + $0x8] sm:$0xff]
    %v57 = vld [vmem:[#allocation5 + $0x10] sm:$0xff]
    %v58 = vld [vmem:[#allocation5 + $0x18] sm:$0xff]
    %v59 = vld [vmem:[#allocation5 + $0x20] sm:$0xff]
    %v60 = vld [vmem:[#allocation5 + $0x28] sm:$0xff]
    %v61 = vld [vmem:[#allocation5 + $0x30] sm:$0xff]
    %v62 = vld [vmem:[#allocation5 + $0x38] sm:$0xff]
    %v63 = vld [vmem:[#allocation5 + $0x40] sm:$0xff]
    %v64 = vld [vmem:[#allocation5 + $0x48] sm:$0xff]
    %v65 = vld [vmem:[#allocation5 + $0x50] sm:$0xff]
    %v66 = vld [vmem:[#allocation5 + $0x58] sm:$0xff]
    %v67 = vld [vmem:[#allocation5 + $0x60] sm:$0xff]
    %v68 = vld [vmem:[#allocation5 + $0x68] sm:$0xff]
    %v69 = vld [vmem:[#allocation5 + $0x70] sm:$0xff]
    %v70 = vld [vmem:[#allocation5 + $0x78] sm:$0xff]
    %71 = vmatprep.subr.mxu0 0.0
    %72 = vmatpush1.msra.mxu0 %v55
    %73 = vmatprep.subr.mxu0 0.0
    %74 = vmatpush1.msra.mxu0 %v56
    %75 = vmatprep.subr.mxu0 0.0
    %76 = vmatpush1.msra.mxu0 %v57
    %77 = vmatprep.subr.mxu0 0.0
    %78 = vmatpush1.msra.mxu0 %v58
    %79 = vmatprep.subr.mxu0 0.0
    %80 = vmatpush1.msra.mxu0 %v59
    %81 = vmatprep.subr.mxu0 0.0
    %82 = vmatpush1.msra.mxu0 %v60
    %83 = vmatprep.subr.mxu0 0.0
    %84 = vmatpush1.msra.mxu0 %v61
    %85 = vmatprep.subr.mxu0 0.0
    %86 = vmatpush1.msra.mxu0 %v62
    %87 = vmatprep.subr.mxu0 0.0
    %88 = vmatpush1.msra.mxu0 %v63
    %89 = vmatprep.subr.mxu0 0.0
    %90 = vmatpush1.msra.mxu0 %v64
    %91 = vmatprep.subr.mxu0 0.0
    %92 = vmatpush1.msra.mxu0 %v65
    %93 = vmatprep.subr.mxu0 0.0
    %94 = vmatpush1.msra.mxu0 %v66
    %95 = vmatprep.subr.mxu0 0.0
    %96 = vmatpush1.msra.mxu0 %v67
    %97 = vmatprep.subr.mxu0 0.0
    %98 = vmatpush1.msra.mxu0 %v68
    %99 = vmatprep.subr.mxu0 0.0
    %100 = vmatpush1.msra.mxu0 %v69
    %101 = vmatprep.subr.mxu0 0.0
    %102 = vmatpush1.msra.mxu0 %v70
    %103 = vmatprep.subr.mxu0 0.0
    %104 = vmatpush1.msra.mxu0 0.0
    %105 = vmatprep.subr.mxu0 0.0
    %106 = vmatpush1.msra.mxu0 0.0
    %107 = vmatprep.subr.mxu0 0.0
    %108 = vmatpush1.msra.mxu0 0.0
    %109 = vmatprep.subr.mxu0 0.0
    %110 = vmatpush1.msra.mxu0 0.0
    %111 = vmatprep.subr.mxu0 0.0
    %112 = vmatpush1.msra.mxu0 0.0
    %113 = vmatprep.subr.mxu0 0.0
    %114 = vmatpush1.msra.mxu0 0.0
    %115 = vmatprep.subr.mxu0 0.0
    %116 = vmatpush1.msra.mxu0 0.0
    %117 = vmatprep.subr.mxu0 0.0
    %118 = vmatpush1.msra.mxu0 0.0
    %119 = vmatprep.subr.mxu0 0.0
    %120 = vmatpush1.msra.mxu0 0.0
    %121 = vmatprep.subr.mxu0 0.0
    %122 = vmatpush1.msra.mxu0 0.0
    %123 = vmatprep.subr.mxu0 0.0
    %124 = vmatpush1.msra.mxu0 0.0
    %125 = vmatprep.subr.mxu0 0.0
    %126 = vmatpush1.msra.mxu0 0.0
    %127 = vmatprep.subr.mxu0 0.0
    %128 = vmatpush1.msra.mxu0 0.0
    %129 = vmatprep.subr.mxu0 0.0
    %130 = vmatpush1.msra.mxu0 0.0
    %131 = vmatprep.subr.mxu0 0.0
    %132 = vmatpush1.msra.mxu0 0.0
    %133 = vmatprep.subr.mxu0 0.0
    %134 = vmatpush1.msra.mxu0 0.0
    %135 = vmatprep.mubr.f32.mxu0 0.0
    %136 = vmatmul.mubr.f32.gmra.mrb[0].mxu0 %v54
    %v137 = vpop.f32.mrb[0].mxu0
    %v138 = vadd.f32 0.0, %v137
    %v139 = vpop.f32.mrb[0].mxu0
    %140 = vdwg.mxu0
    %v141 = vadd.f32 %v53, %v138
    %142 = vst [vmem:[#allocation7] sm:$0xff] %v141
    // Predicated region
    $region26: #{tpu_custom_call.1} parent=1 // pred_check
      _
    $region27: #{tpu_custom_call.1} parent=1 // pred_check_branch
      %144 = sbr.rel (0) target = $region29
    $region28: #{tpu_custom_call.1} parent=1 // pred_region
      %s146 = ssub.s32 128, 128
      %147 = vsyncadd [#allocation4], %s146
      %s149 = sshll.u32 [#allocation7], 4
      %s150 = int_to_ptr.vmem [resolvable:$true] %s149
      %152 = dma.vmem_to_hbm [thread:$0]  %s150, 128, %s3, [#allocation4]
    $region29: #{tpu_custom_call.1} parent=1 // pred_fallthru
      _
    // Predicated region
    $region30: #{tpu_custom_call.1} parent=1 // pred_check
      _
    $region31: #{tpu_custom_call.1} parent=1 // pred_check_branch
      %154 = sbr.rel (0) target = $region33
    $region32: #{tpu_custom_call.1} parent=1 // pred_region
      %155 = dma.done [#allocation4], 128
    $region33: #{tpu_custom_call.1} parent=1 // pred_fallthru
      _
    %156 = vsyncpa [#allocation3], 1
    %157 = vsyncpa [#allocation6], 1
    %158 = vsyncpa [#allocation4], 1

</llo_original>
